<compile_context>
chip_gen: v7x
topology: tpu7x:2x2x1
jax: 0.10.0
libtpu: 0.0.40
codegen_flags: <defaults>
</compile_context>

<pallas_src>
import jax
import jax.numpy as jnp
from jax.experimental import pallas as pl
from jax.experimental.pallas import tpu as pltpu

IGNORE_INDEX = -100  # matches MusicAutoregressiveWrapper(ignore_index=-100)

# 9 token fields, matching encoding['dimensions'] with 'type' at index 0:
FIELDS = ('type', 'beat', 'position', 'pitch', 'duration', 'instrument',
          'timesignaturenumerator', 'timesignaturedenominator', 'tempo')
D_FIELDS = len(FIELDS)              # 9
VOCAB = 16                          # per-field vocab (same for all fields)
PROMPT_VOCAB = 16                   # prompt / attribute classes
HIDDEN = 32                         # synthetic net hidden size

NUM_HEADS = D_FIELDS + 1            # 9 field heads + 1 prompt head
HEAD_W = 16                         # dense per-head slot width (== per-head vocab)
assert VOCAB == HEAD_W and PROMPT_VOCAB == HEAD_W
VTOT = NUM_HEADS * HEAD_W           # 160 real fused logit columns
PACK_W = 16                         # id / target / head-lane width (10 real + 6 pad)
VTOT_PAD = PACK_W * HEAD_W          # 256 packed logit columns (lane aligned)
NEG_PAD = -1e30                     # bias of pad columns (exp underflows to 0)
CORE_SPLIT = 2                      # leading parallel grid axis (v7x megacore)


# ----------------------------------------------------------------------------
# Fused kernel: embedding gather -> MLP -> packed head logits -> masked CE
# ----------------------------------------------------------------------------
def _fused_kernel(ids_ref, tgt_ref, emb_ref, w1_ref, b1_ref, wout_ref, bout_ref,
                  expand_ref, seg_ref, out_ref):
    """One row-tile step.

    out_ref view is (1, 2, PACK_W): [:,0,d] accumulates the summed CE of head d,
    [:,1,d] the count of valid (non-ignored) targets.  It is resident across
    grid axis 1 (the row reduction); each grid-axis-0 coordinate (core) gets
    its own independent block, so the parallel split cannot race.
    """
    @pl.when(pl.program_id(1) == 0)
    def _init():
        out_ref[...] = jnp.zeros_like(out_ref)

    # Hoisted lane constants — there is no per-head loop anymore, so exactly
    # one iota / one modulo for the whole tile.
    col = jax.lax.broadcasted_iota(jnp.int32, (1, VTOT_PAD), 1)
    colmod = (col & (HEAD_W - 1)).astype(jnp.float32)          # packed column % 16

    expand = expand_ref[...]                                   # (16, 256) 0/1
    seg = seg_ref[...]                                         # (256, 16) 0/1

    # ---- fused embedding gather: one-hot(ids) @ emb_table on the MXU ----
    ids_exp = jnp.dot(ids_ref[...].astype(jnp.float32), expand,
                      preferred_element_type=jnp.float32)      # id of each column's slot
    counts = (ids_exp == colmod).astype(jnp.float32)           # one hit per real slot
    h = jnp.dot(counts, emb_ref[...],
                preferred_element_type=jnp.float32)            # (tile, 32) summed embeddings

    # ---- MLP -> densely packed head logits (bf16 MXU inputs, f32 accumulate) ----
    z = jnp.dot(h.astype(jnp.bfloat16), w1_ref[...],
                preferred_element_type=jnp.float32) + b1_ref[...]
    z = jnp.maximum(z, 0.0).astype(jnp.bfloat16)               # ReLU
    logits = jnp.dot(z, wout_ref[...],
                     preferred_element_type=jnp.float32) + bout_ref[...]   # (tile, 256)

    # ---- packed-head masked cross-entropy (segment reductions on the MXU) ----
    tgt = tgt_ref[...]                                         # (tile, 16) int32
    tgt_exp = jnp.dot(tgt.astype(jnp.float32), expand,
                      preferred_element_type=jnp.float32)      # target id per column's slot
    is_tgt = tgt_exp == colmod                                 # target one-hot, all heads at once
    rowmax = jnp.max(logits, axis=-1, keepdims=True)           # shared max (pad cols = -1e30)
    e = jnp.exp(logits - rowmax)                               # pad cols underflow to 0
    sumexp = jnp.dot(e, seg, preferred_element_type=jnp.float32)             # (tile, 16)
    tgt_logit = jnp.dot(jnp.where(is_tgt, logits, 0.0), seg,
                        preferred_element_type=jnp.float32)                  # (tile, 16)
    valid = (tgt != IGNORE_INDEX).astype(jnp.float32)          # (tile, 16)
    # Guard head lanes with no columns (pad lanes 10..15) against log(0).
    lse = rowmax + jnp.log(jnp.maximum(sumexp, 1e-30))
    loss_rows = valid * (lse - tgt_logit)

    # Single (2,16) accumulator update per tile (one store, lane-packed heads).
    upd = jnp.concatenate([jnp.sum(loss_rows, axis=0, keepdims=True),
                           jnp.sum(valid, axis=0, keepdims=True)], axis=0)
    out_ref[...] += upd.reshape(1, 2, PACK_W)


def _fused_ce_loss(ids_pad, tgt_pad, emb_t, w1, b1, wout, bout, expand, seg,
                   tile_n, tiles_per_core):
    row_map = lambda c, i: (c * tiles_per_core + i, 0)
    const = lambda c, i: (0, 0)
    return pl.pallas_call(
        _fused_kernel,
        grid=(CORE_SPLIT, tiles_per_core),
        in_specs=[
            pl.BlockSpec((tile_n, PACK_W), row_map),           # token+prompt ids (int32)
            pl.BlockSpec((tile_n, PACK_W), row_map),           # targets (int32)
            pl.BlockSpec((VTOT_PAD, HIDDEN), const),           # fused embedding table (f32)
            pl.BlockSpec((HIDDEN, HIDDEN), const),             # w1 (bf16)
            pl.BlockSpec((1, HIDDEN), const),                  # b1 (f32)
            pl.BlockSpec((HIDDEN, VTOT_PAD), const),           # wout (bf16, packed heads)
            pl.BlockSpec((1, VTOT_PAD), const),                # bout (pad cols = -1e30)
            pl.BlockSpec((PACK_W, VTOT_PAD), const),           # slot-expansion matrix
            pl.BlockSpec((VTOT_PAD, PACK_W), const),           # segment-sum matrix
        ],
        out_specs=pl.BlockSpec((1, 2, PACK_W), lambda c, i: (c, 0, 0)),
        out_shape=jax.ShapeDtypeStruct((CORE_SPLIT, 2, PACK_W), jnp.float32),
        compiler_params=pltpu.CompilerParams(
            # axis 0: independent accumulator per core -> parallel (v7x 2 TCs);
            # axis 1: row reduction into the resident block -> arbitrary.
            dimension_semantics=("parallel", "arbitrary")),
    )(ids_pad, tgt_pad, emb_t, w1, b1, wout, bout, expand, seg)


# ----------------------------------------------------------------------------
# Parameters (deterministic, synthetic — shapes implied by forward())
# ----------------------------------------------------------------------------
def init_params(key):
    k0, k1, k2, k3 = jax.random.split(key, 4)
    return {
        'emb': 0.02 * jax.random.normal(k0, (D_FIELDS, VOCAB, HIDDEN), jnp.float32),
        'prompt_emb': 0.02 * jax.random.normal(k1, (PROMPT_VOCAB, HIDDEN), jnp.float32),
        'w1': jax.random.normal(k2, (HIDDEN, HIDDEN), jnp.float32) / jnp.sqrt(HIDDEN),
        'b1': jnp.zeros((1, HIDDEN), jnp.float32),
        'wout': jax.random.normal(k3, (HIDDEN, VTOT), jnp.float32) / jnp.sqrt(HIDDEN),
        'bout': jnp.zeros((1, VTOT), jnp.float32),
    }


def _pack_params(params):
    """Pack weights into the dense-head layout + build the 0/1 routing matrices."""
    emb_t = jnp.zeros((VTOT_PAD, HIDDEN), jnp.float32)
    emb_t = emb_t.at[:D_FIELDS * VOCAB].set(params['emb'].reshape(D_FIELDS * VOCAB, HIDDEN))
    emb_t = emb_t.at[D_FIELDS * VOCAB:VTOT].set(params['prompt_emb'])
    w1 = params['w1'].astype(jnp.bfloat16)
    b1 = params['b1']
    wout = (jnp.zeros((HIDDEN, VTOT_PAD), jnp.float32)
            .at[:, :VTOT].set(params['wout']).astype(jnp.bfloat16))
    bout = (jnp.full((1, VTOT_PAD), NEG_PAD, jnp.float32)
            .at[:, :VTOT].set(params['bout']))
    slot = jnp.arange(VTOT_PAD, dtype=jnp.int32) // HEAD_W      # packed column -> slot id
    lane = jnp.arange(PACK_W, dtype=jnp.int32)
    expand = (lane[:, None] == slot[None, :]).astype(jnp.float32)          # (16, 256)
    seg = ((slot[:, None] == lane[None, :]) &
           (slot[:, None] < NUM_HEADS)).astype(jnp.float32)                # (256, 16)
    return emb_t, w1, b1, wout, bout, expand, seg


def _choose_tile(n):
    # Row tile: multiple of 8/16 sublanes.  512 amortizes the ~0.35us per-step
    # overhead (measured 256->512 moves mem-bound kernels ~63%->85% of roofline)
    # while the packed-head working set stays ~4 MiB — far under 64/128 MiB VMEM
    # and the 32 MiB scoped default on every generation.  Tiny inputs use 16 so
    # the multi-step / two-core accumulate path is still exercised.
    return 512 if n >= 1024 else 16


# ----------------------------------------------------------------------------
# MusicAutoregressiveWrapper.forward
# ----------------------------------------------------------------------------
def music_wrapper_forward(params, x, prompt, attribute, return_list=False):
    B, T, D = x.shape
    assert D == D_FIELDS
    xi, xo, pi = x[:, :-1], x[:, 1:], prompt[:, :-1]
    n = B * (T - 1)

    # Only int32 ids / targets are streamed to the kernel (~128 B per row total);
    # embeddings, logits and h never touch HBM.
    ids = jnp.concatenate(
        [xi.reshape(n, D_FIELDS), pi.reshape(n, 1)], axis=1).astype(jnp.int32)
    tgt = jnp.concatenate(
        [xo.reshape(n, D_FIELDS), attribute[:, :-1].reshape(n, 1)],
        axis=1).astype(jnp.int32)

    tile_n = _choose_tile(n)
    n_pad = ((n + 2 * tile_n - 1) // (2 * tile_n)) * (2 * tile_n)
    tiles_per_core = n_pad // (2 * tile_n)

    ids_pad = jnp.full((n_pad, PACK_W), -1, jnp.int32).at[:n, :NUM_HEADS].set(ids)
    tgt_pad = (jnp.full((n_pad, PACK_W), IGNORE_INDEX, jnp.int32)
               .at[:n, :NUM_HEADS].set(tgt))

    packed = _pack_params(params)
    acc = _fused_ce_loss(ids_pad, tgt_pad, *packed,
                         tile_n=tile_n, tiles_per_core=tiles_per_core)  # (2, 2, 16)
    sums = jnp.sum(acc[:, 0, :NUM_HEADS], axis=0)
    cnts = jnp.sum(acc[:, 1, :NUM_HEADS], axis=0)
    # Guard all-ignored heads with 0 (PyTorch F.cross_entropy would give NaN there).
    losses_vec = jnp.where(cnts > 0, sums / jnp.maximum(cnts, 1.0), 0.0)
    loss = jnp.sum(losses_vec)

    if return_list:
        return loss, [losses_vec[d] for d in range(NUM_HEADS)]
    return loss


# ----------------------------------------------------------------------------
# Pure-JAX references (silent correctness checks)
# ----------------------------------------------------------------------------
def _reference_forward(params, x, prompt, attribute, mxu_bf16=True):
    B, T, _ = x.shape
    xi, xo, pi = x[:, :-1], x[:, 1:], prompt[:, :-1]
    n = B * (T - 1)
    flat_emb = params['emb'].reshape(D_FIELDS * VOCAB, HIDDEN)
    idx = xi + (jnp.arange(D_FIELDS, dtype=xi.dtype) * VOCAB)
    h = jnp.sum(flat_emb[idx], axis=2) + params['prompt_emb'][pi]
    h = h.reshape(n, HIDDEN)

    cast = (lambda a: a.astype(jnp.bfloat16)) if mxu_bf16 else (lambda a: a)
    z = jnp.dot(cast(h), cast(params['w1']),
                preferred_element_type=jnp.float32) + params['b1']
    z = jnp.maximum(z, 0.0)
    logits_all = jnp.dot(cast(z), cast(params['wout']),
                         preferred_element_type=jnp.float32) + params['bout']

    def ce(lg, tg):
        lse = jax.scipy.special.logsumexp(lg, axis=-1)
        tl = jnp.take_along_axis(lg, jnp.maximum(tg, 0)[:, None], axis=-1)[:, 0]
        valid = tg != IGNORE_INDEX
        return jnp.sum(jnp.where(valid, lse - tl, 0.0)) / jnp.sum(valid)

    loss = 0.0
    for d in range(D_FIELDS):
        loss = loss + ce(logits_all[:, d * VOCAB:(d + 1) * VOCAB],
                         xo[..., d].reshape(-1))
    loss = loss + ce(logits_all[:, D_FIELDS * VOCAB:], attribute[:, :-1].reshape(-1))
    return loss


if __name__ == "__main__":
    key = jax.random.PRNGKey(0)
    kp, kx, kpr, kat = jax.random.split(key, 4)

    B, T = 2, 8
    params = init_params(kp)
    x = jax.random.randint(kx, (B, T, D_FIELDS), 1, VOCAB, dtype=jnp.int32)
    prompt = jax.random.randint(kpr, (B, T), 0, PROMPT_VOCAB, dtype=jnp.int32)
    attribute = jax.random.randint(kat, (B, T), 0, PROMPT_VOCAB, dtype=jnp.int32)

    loss, losses = music_wrapper_forward(params, x, prompt, attribute, return_list=True)
    loss = jax.block_until_ready(loss)
    assert len(losses) == NUM_HEADS

    # Tight check vs a reference using the same bf16-input / f32-accumulate matmuls
    # (kernel's fused one-hot-matmul gather differs from the XLA gather only by
    #  f32-matmul rounding, well inside this tolerance).
    ref_bf16 = jax.block_until_ready(
        _reference_forward(params, x, prompt, attribute, mxu_bf16=True))
    assert jnp.abs(loss - ref_bf16) < 1e-2, (loss, ref_bf16)

    # Loose semantic check vs the full-f32 forward.
    ref_f32 = jax.block_until_ready(
        _reference_forward(params, x, prompt, attribute, mxu_bf16=False))
    assert jnp.abs(loss - ref_f32) < 0.25, (loss, ref_f32)

    print("KERNEL_OK")
</pallas_src>

<mosaic_0001>
module attributes {stable_mosaic.version = 11 : i64} {
  func.func @_fused_kernel(%arg0: i32, %arg1: i32, %arg2: memref<16x16xi32, #tpu.memory_space<vmem>>, %arg3: memref<16x16xi32, #tpu.memory_space<vmem>>, %arg4: memref<256x32xf32, #tpu.memory_space<vmem>>, %arg5: memref<32x32xbf16, #tpu.memory_space<vmem>>, %arg6: memref<1x32xf32, #tpu.memory_space<vmem>>, %arg7: memref<32x256xbf16, #tpu.memory_space<vmem>>, %arg8: memref<1x256xf32, #tpu.memory_space<vmem>>, %arg9: memref<16x256xf32, #tpu.memory_space<vmem>>, %arg10: memref<256x16xf32, #tpu.memory_space<vmem>>, %arg11: memref<1x2x16xf32, #tpu.memory_space<vmem>>) attributes {dimension_semantics = [#tpu.dimension_semantics<parallel>, #tpu.dimension_semantics<arbitrary>], iteration_bounds = array<i64: 2, 1>, scalar_prefetch = 0 : i64, scratch_operands = 0 : i64, tpu.core_type = #tpu.core_type<tc>, window_params = [{transform_indices = @transform_0, window_bounds = array<i64: 16, 16>}, {transform_indices = @transform_1, window_bounds = array<i64: 16, 16>}, {pipeline_mode = #tpu.pipeline_mode<synchronous>, transform_indices = @transform_2, window_bounds = array<i64: 256, 32>}, {pipeline_mode = #tpu.pipeline_mode<synchronous>, transform_indices = @transform_3, window_bounds = array<i64: 32, 32>}, {pipeline_mode = #tpu.pipeline_mode<synchronous>, transform_indices = @transform_4, window_bounds = array<i64: 1, 32>}, {pipeline_mode = #tpu.pipeline_mode<synchronous>, transform_indices = @transform_5, window_bounds = array<i64: 32, 256>}, {pipeline_mode = #tpu.pipeline_mode<synchronous>, transform_indices = @transform_6, window_bounds = array<i64: 1, 256>}, {pipeline_mode = #tpu.pipeline_mode<synchronous>, transform_indices = @transform_7, window_bounds = array<i64: 16, 256>}, {pipeline_mode = #tpu.pipeline_mode<synchronous>, transform_indices = @transform_8, window_bounds = array<i64: 256, 16>}, {transform_indices = @transform_9, window_bounds = array<i64: 1, 2, 16>}]} {
    %c0_i32 = arith.constant 0 : i32
    %0 = arith.cmpi eq, %arg1, %c0_i32 : i32
    %1 = arith.extui %0 : i1 to i32
    %c0_i32_0 = arith.constant 0 : i32
    %2 = arith.cmpi ne, %1, %c0_i32_0 : i32
    scf.if %2 {
      %cst_36 = arith.constant 0.000000e+00 : f32
      %66 = vector.broadcast %cst_36 : f32 to vector<1x2x16xf32>
      %c0_37 = arith.constant 0 : index
      %c0_38 = arith.constant 0 : index
      %c0_39 = arith.constant 0 : index
      %67 = vector.load %arg11[%c0_37, %c0_38, %c0_39] : memref<1x2x16xf32, #tpu.memory_space<vmem>>, vector<1x2x16xf32>
      tpu.vector_store %arg11[%c0_37, %c0_38, %c0_39], %66 {strides = array<i32>} : memref<1x2x16xf32, #tpu.memory_space<vmem>>, vector<1x2x16xf32>,
    } else {
    }
    %3 = tpu.iota {dimensions = array<i32: 1>} : vector<1x256xi32>
    %c15_i32 = arith.constant 15 : i32
    %4 = vector.broadcast %c15_i32 : i32 to vector<1x256xi32>
    %5 = arith.andi %3, %4 : vector<1x256xi32>
    %6 = arith.sitofp %5 : vector<1x256xi32> to vector<1x256xf32>
    %c0 = arith.constant 0 : index
    %c0_1 = arith.constant 0 : index
    %7 = vector.load %arg9[%c0, %c0_1] : memref<16x256xf32, #tpu.memory_space<vmem>>, vector<16x256xf32>
    %c0_2 = arith.constant 0 : index
    %c0_3 = arith.constant 0 : index
    %8 = vector.load %arg10[%c0_2, %c0_3] : memref<256x16xf32, #tpu.memory_space<vmem>>, vector<256x16xf32>
    %c0_4 = arith.constant 0 : index
    %c0_5 = arith.constant 0 : index
    %9 = vector.load %arg2[%c0_4, %c0_5] : memref<16x16xi32, #tpu.memory_space<vmem>>, vector<16x16xi32>
    %10 = arith.sitofp %9 : vector<16x16xi32> to vector<16x16xf32>
    %cst = arith.constant dense<0.000000e+00> : vector<16x256xf32>
    %11 = tpu.matmul %10, %7, %cst {dimension_numbers = #tpu.dot_dimension_numbers<[1], [0], [0], [1], [0, 0, 1, 1], [], []>} : vector<16x16xf32>, vector<16x256xf32>, vector<16x256xf32> -> vector<16x256xf32>
    %12 = vector.broadcast %6 : vector<1x256xf32> to vector<16x256xf32>
    %13 = arith.cmpf oeq, %11, %12 : vector<16x256xf32>
    %14 = arith.extui %13 : vector<16x256xi1> to vector<16x256xi32>
    %15 = arith.sitofp %14 : vector<16x256xi32> to vector<16x256xf32>
    %c0_6 = arith.constant 0 : index
    %c0_7 = arith.constant 0 : index
    %16 = vector.load %arg4[%c0_6, %c0_7] : memref<256x32xf32, #tpu.memory_space<vmem>>, vector<256x32xf32>
    %cst_8 = arith.constant dense<0.000000e+00> : vector<16x32xf32>
    %17 = tpu.matmul %15, %16, %cst_8 {dimension_numbers = #tpu.dot_dimension_numbers<[1], [0], [0], [1], [0, 0, 1, 1], [], []>} : vector<16x256xf32>, vector<256x32xf32>, vector<16x32xf32> -> vector<16x32xf32>
    %18 = arith.truncf %17 : vector<16x32xf32> to vector<16x32xbf16>
    %c0_9 = arith.constant 0 : index
    %c0_10 = arith.constant 0 : index
    %19 = vector.load %arg5[%c0_9, %c0_10] : memref<32x32xbf16, #tpu.memory_space<vmem>>, vector<32x32xbf16>
    %cst_11 = arith.constant dense<0.000000e+00> : vector<16x32xf32>
    %20 = tpu.matmul %18, %19, %cst_11 {dimension_numbers = #tpu.dot_dimension_numbers<[1], [0], [0], [1], [0, 0, 1, 1], [], []>} : vector<16x32xbf16>, vector<32x32xbf16>, vector<16x32xf32> -> vector<16x32xf32>
    %c0_12 = arith.constant 0 : index
    %c0_13 = arith.constant 0 : index
    %21 = vector.load %arg6[%c0_12, %c0_13] : memref<1x32xf32, #tpu.memory_space<vmem>>, vector<1x32xf32>
    %22 = vector.broadcast %21 : vector<1x32xf32> to vector<16x32xf32>
    %23 = arith.addf %20, %22 : vector<16x32xf32>
    %cst_14 = arith.constant 0.000000e+00 : f32
    %24 = vector.broadcast %cst_14 : f32 to vector<16x32xf32>
    %25 = arith.maximumf %23, %24 : vector<16x32xf32>
    %26 = arith.truncf %25 : vector<16x32xf32> to vector<16x32xbf16>
    %c0_15 = arith.constant 0 : index
    %c0_16 = arith.constant 0 : index
    %27 = vector.load %arg7[%c0_15, %c0_16] : memref<32x256xbf16, #tpu.memory_space<vmem>>, vector<32x256xbf16>
    %cst_17 = arith.constant dense<0.000000e+00> : vector<16x256xf32>
    %28 = tpu.matmul %26, %27, %cst_17 {dimension_numbers = #tpu.dot_dimension_numbers<[1], [0], [0], [1], [0, 0, 1, 1], [], []>} : vector<16x32xbf16>, vector<32x256xbf16>, vector<16x256xf32> -> vector<16x256xf32>
    %c0_18 = arith.constant 0 : index
    %c0_19 = arith.constant 0 : index
    %29 = vector.load %arg8[%c0_18, %c0_19] : memref<1x256xf32, #tpu.memory_space<vmem>>, vector<1x256xf32>
    %30 = vector.broadcast %29 : vector<1x256xf32> to vector<16x256xf32>
    %31 = arith.addf %28, %30 : vector<16x256xf32>
    %c0_20 = arith.constant 0 : index
    %c0_21 = arith.constant 0 : index
    %32 = vector.load %arg3[%c0_20, %c0_21] : memref<16x16xi32, #tpu.memory_space<vmem>>, vector<16x16xi32>
    %33 = arith.sitofp %32 : vector<16x16xi32> to vector<16x16xf32>
    %cst_22 = arith.constant dense<0.000000e+00> : vector<16x256xf32>
    %34 = tpu.matmul %33, %7, %cst_22 {dimension_numbers = #tpu.dot_dimension_numbers<[1], [0], [0], [1], [0, 0, 1, 1], [], []>} : vector<16x16xf32>, vector<16x256xf32>, vector<16x256xf32> -> vector<16x256xf32>
    %35 = vector.broadcast %6 : vector<1x256xf32> to vector<16x256xf32>
    %36 = arith.cmpf oeq, %34, %35 : vector<16x256xf32>
    %cst_23 = arith.constant dense<0xFF800000> : vector<16xf32>
    %37 = vector.multi_reduction <maximumf>, %31, %cst_23 [1] : vector<16x256xf32> to vector<16xf32>
    %38 = vector.shape_cast %37 : vector<16xf32> to vector<16x1xf32>
    %39 = vector.broadcast %38 : vector<16x1xf32> to vector<16x256xf32>
    %40 = arith.subf %31, %39 : vector<16x256xf32>
    %41 = math.exp %40 : vector<16x256xf32>
    %cst_24 = arith.constant dense<0.000000e+00> : vector<16x16xf32>
    %42 = tpu.matmul %41, %8, %cst_24 {dimension_numbers = #tpu.dot_dimension_numbers<[1], [0], [0], [1], [0, 0, 1, 1], [], []>} : vector<16x256xf32>, vector<256x16xf32>, vector<16x16xf32> -> vector<16x16xf32>
    %cst_25 = arith.constant 0.000000e+00 : f32
    %43 = vector.broadcast %cst_25 : f32 to vector<16x256xf32>
    %44 = arith.select %36, %31, %43 : vector<16x256xi1>, vector<16x256xf32>
    %cst_26 = arith.constant dense<0.000000e+00> : vector<16x16xf32>
    %45 = tpu.matmul %44, %8, %cst_26 {dimension_numbers = #tpu.dot_dimension_numbers<[1], [0], [0], [1], [0, 0, 1, 1], [], []>} : vector<16x256xf32>, vector<256x16xf32>, vector<16x16xf32> -> vector<16x16xf32>
    %c-100_i32 = arith.constant -100 : i32
    %46 = vector.broadcast %c-100_i32 : i32 to vector<16x16xi32>
    %47 = arith.cmpi ne, %32, %46 : vector<16x16xi32>
    %48 = arith.extui %47 : vector<16x16xi1> to vector<16x16xi32>
    %49 = arith.sitofp %48 : vector<16x16xi32> to vector<16x16xf32>
    %cst_27 = arith.constant 1.000000e-30 : f32
    %50 = vector.broadcast %cst_27 : f32 to vector<16x16xf32>
    %51 = arith.maximumf %42, %50 : vector<16x16xf32>
    %52 = math.log %51 : vector<16x16xf32>
    %53 = vector.broadcast %38 : vector<16x1xf32> to vector<16x16xf32>
    %54 = arith.addf %53, %52 : vector<16x16xf32>
    %55 = arith.subf %54, %45 : vector<16x16xf32>
    %56 = arith.mulf %49, %55 : vector<16x16xf32>
    %cst_28 = arith.constant dense<0.000000e+00> : vector<16xf32>
    %57 = vector.multi_reduction <add>, %56, %cst_28 [0] : vector<16x16xf32> to vector<16xf32>
    %58 = vector.shape_cast %57 : vector<16xf32> to vector<1x16xf32>
    %cst_29 = arith.constant dense<0.000000e+00> : vector<16xf32>
    %59 = vector.multi_reduction <add>, %49, %cst_29 [0] : vector<16x16xf32> to vector<16xf32>
    %60 = vector.shape_cast %59 : vector<16xf32> to vector<1x16xf32>
    %61 = tpu.concatenate %58, %60 in 0 : vector<1x16xf32>, vector<1x16xf32> -> vector<2x16xf32>
    %c0_30 = arith.constant 0 : index
    %c0_31 = arith.constant 0 : index
    %c0_32 = arith.constant 0 : index
    %62 = vector.load %arg11[%c0_30, %c0_31, %c0_32] : memref<1x2x16xf32, #tpu.memory_space<vmem>>, vector<1x2x16xf32>
    %63 = vector.shape_cast %61 : vector<2x16xf32> to vector<1x2x16xf32>
    %64 = arith.addf %62, %63 : vector<1x2x16xf32>
    %c0_33 = arith.constant 0 : index
    %c0_34 = arith.constant 0 : index
    %c0_35 = arith.constant 0 : index
    %65 = vector.load %arg11[%c0_33, %c0_34, %c0_35] : memref<1x2x16xf32, #tpu.memory_space<vmem>>, vector<1x2x16xf32>
    tpu.vector_store %arg11[%c0_33, %c0_34, %c0_35], %64 {strides = array<i32>} : memref<1x2x16xf32, #tpu.memory_space<vmem>>, vector<1x2x16xf32>,
    return
  }
  func.func @transform_0(%arg0: i32, %arg1: i32) -> (i32, i32) {
    %c1_i32 = arith.constant 1 : i32
    %0 = arith.muli %arg0, %c1_i32 : i32
    %1 = arith.addi %0, %arg1 : i32
    %c0_i32 = arith.constant 0 : i32
    %c0_i32_0 = arith.constant 0 : i32
    return %1, %c0_i32 : i32, i32
  }
  func.func @transform_1(%arg0: i32, %arg1: i32) -> (i32, i32) {
    %c1_i32 = arith.constant 1 : i32
    %0 = arith.muli %arg0, %c1_i32 : i32
    %1 = arith.addi %0, %arg1 : i32
    %c0_i32 = arith.constant 0 : i32
    %c0_i32_0 = arith.constant 0 : i32
    return %1, %c0_i32 : i32, i32
  }
  func.func @transform_2(%arg0: i32, %arg1: i32) -> (i32, i32) {
    %c0_i32 = arith.constant 0 : i32
    %c0_i32_0 = arith.constant 0 : i32
    %c0_i32_1 = arith.constant 0 : i32
    return %c0_i32, %c0_i32_0 : i32, i32
  }
  func.func @transform_3(%arg0: i32, %arg1: i32) -> (i32, i32) {
    %c0_i32 = arith.constant 0 : i32
    %c0_i32_0 = arith.constant 0 : i32
    %c0_i32_1 = arith.constant 0 : i32
    return %c0_i32, %c0_i32_0 : i32, i32
  }
  func.func @transform_4(%arg0: i32, %arg1: i32) -> (i32, i32) {
    %c0_i32 = arith.constant 0 : i32
    %c0_i32_0 = arith.constant 0 : i32
    %c0_i32_1 = arith.constant 0 : i32
    return %c0_i32, %c0_i32_0 : i32, i32
  }
  func.func @transform_5(%arg0: i32, %arg1: i32) -> (i32, i32) {
    %c0_i32 = arith.constant 0 : i32
    %c0_i32_0 = arith.constant 0 : i32
    %c0_i32_1 = arith.constant 0 : i32
    return %c0_i32, %c0_i32_0 : i32, i32
  }
  func.func @transform_6(%arg0: i32, %arg1: i32) -> (i32, i32) {
    %c0_i32 = arith.constant 0 : i32
    %c0_i32_0 = arith.constant 0 : i32
    %c0_i32_1 = arith.constant 0 : i32
    return %c0_i32, %c0_i32_0 : i32, i32
  }
  func.func @transform_7(%arg0: i32, %arg1: i32) -> (i32, i32) {
    %c0_i32 = arith.constant 0 : i32
    %c0_i32_0 = arith.constant 0 : i32
    %c0_i32_1 = arith.constant 0 : i32
    return %c0_i32, %c0_i32_0 : i32, i32
  }
  func.func @transform_8(%arg0: i32, %arg1: i32) -> (i32, i32) {
    %c0_i32 = arith.constant 0 : i32
    %c0_i32_0 = arith.constant 0 : i32
    %c0_i32_1 = arith.constant 0 : i32
    return %c0_i32, %c0_i32_0 : i32, i32
  }
  func.func @transform_9(%arg0: i32, %arg1: i32) -> (i32, i32, i32) {
    %c0_i32 = arith.constant 0 : i32
    %c0_i32_0 = arith.constant 0 : i32
    %c0_i32_1 = arith.constant 0 : i32
    return %arg0, %c0_i32, %c0_i32_0 : i32, i32, i32
  }
}

</mosaic_0001>

<llo_original>
// kernel: tpu_custom_call.1
$region0: #{tpu_custom_call.1}
  #allocation0 [shape = 'u32[]', space=smem, size = 0x4, offset = 0x4, fixed_abs, tag = 'smem constant byte address 0x4 - core index']
  #allocation1 [shape = 'u32[144,128]{1,0:T(1,128)}', space=vmem, size = 0x12000, scoped, tag = 'internal scratch']
  %s0 = inlined_call_operand.vmem [shape: s32[32,16], index: 0, kind: input, shape index: {}]
  %s1 = inlined_call_operand.vmem [shape: s32[32,16], index: 1, kind: input, shape index: {}]
  %s2 = inlined_call_operand.vmem [shape: f32[256,32], index: 2, kind: input, shape index: {}]
  %s3 = inlined_call_operand.vmem [shape: bf16[32,32], index: 3, kind: input, shape index: {}]
  %s4 = inlined_call_operand.vmem [shape: f32[1,32], index: 4, kind: input, shape index: {}]
  %s5 = inlined_call_operand.vmem [shape: bf16[32,256], index: 5, kind: input, shape index: {}]
  %s6 = inlined_call_operand.vmem [shape: f32[1,256], index: 6, kind: input, shape index: {}]
  %s7 = inlined_call_operand.vmem [shape: f32[16,256], index: 7, kind: input, shape index: {}]
  %s8 = inlined_call_operand.vmem [shape: f32[256,16], index: 8, kind: input, shape index: {}]
  %s9 = inlined_call_operand.hbm [shape: f32[2,2,16], index: 9, kind: output, shape index: {}]
  %s10 = sld [smem:[#allocation0]]
  $region73: #{tpu_custom_call.1} parent=0
    _
  %s12 = ssub.s32 1, %s10
  %s13 = scalar_select 0, %s12, %s10
  $region1: #{tpu_custom_call.1} parent=0
    #allocation2 [shape = 'u8[2048]{0}', space=vmem, size = 0x800, scoped, tag = 'output window, operand 0']
    #allocation3 [shape = 's32[2]{0}', space=sflag, size = 0x8, scoped, tag = 'scoped memory for tpu_custom_call.1']
    %14 = vsyncpa [#allocation3], 0
    %s15 = scalar_lea.sflag [#allocation3], 1
    %16 = vsyncpa %s15, 0
    loop: start=0, step=1, limit=4
    $region2: #{tpu_custom_call.1} parent=1 // loop_pre_header
      _
    $region3: #{tpu_custom_call.1} parent=1 // loop_header
      %s18 = sphi 0, %s22
      %p19 = scmp.ge.s32.totalorder %s18, 4
      %s25 = sphi 0, %s37
      %s26 = sphi 0, %s33
      %s27 = sphi 0, %s25
      %s28 = sphi 0, %s26
      %s29 = sphi 0, %s27
      %s30 = sphi 0, %s28
      %s42 = sphi 0, %s44
      %s45 = sphi 0, %s42
      %s46 = sphi 0, %s45
      %s62 = sphi 0, %s46
      %s70 = sphi 0, %s72
      %s73 = sphi 0, %s70
      %s74 = sphi 0, %s73
      %s90 = sphi 0, %s74
      %s94 = sphi 0, %s94
      %s96 = sphi 0, %s94
      %s97 = sphi 0, %s96
      %s111 = sphi 0, %s97
      %s115 = sphi 0, %s115
      %s117 = sphi 0, %s115
      %s118 = sphi 0, %s117
      %s132 = sphi 0, %s118
      %s136 = sphi 0, %s136
      %s138 = sphi 0, %s136
      %s139 = sphi 0, %s138
      %s153 = sphi 0, %s139
      %s157 = sphi 0, %s157
      %s159 = sphi 0, %s157
      %s160 = sphi 0, %s159
      %s174 = sphi 0, %s160
      %s178 = sphi 0, %s178
      %s180 = sphi 0, %s178
      %s181 = sphi 0, %s180
      %s195 = sphi 0, %s181
      %s199 = sphi 0, %s199
      %s201 = sphi 0, %s199
      %s202 = sphi 0, %s201
      %s216 = sphi 0, %s202
      %s220 = sphi 0, %s220
      %s222 = sphi 0, %s220
      %s223 = sphi 0, %s222
      %s237 = sphi 0, %s223
      %s243 = sphi 0, %s245
      %s246 = sphi 0, %s243
      %s247 = sphi 0, %s246
      %s263 = sphi 0, %s247
    $region4: #{tpu_custom_call.1} parent=1 // loop_header_branch
      %21 = sbr.rel (%p19) target = $region8
    $region5: #{tpu_custom_call.1} parent=1 // loop_body
      %s23 = ssub.s32 %s18, 1
      %s24 = ssub.s32 %s18, 2
      %s31 = sadd.s32 1, %s26
      %p32 = scmp.ge.s32.totalorder %s31, 1
      %s33 = scalar_select %p32, 0, %s31
      %s34 = sadd.s32 1, %s25
      %s35 = scalar_select %p32, %s34, %s25
      %p36 = scmp.ge.s32.totalorder %s35, 2
      %s37 = scalar_select %p36, 0, %s35
      %s38 = sadd.s32 %s25, %s26
      %s39 = sadd.s32 %s37, %s33
      %s40 = ssub.s32 %s38, %s39
      %p41 = scmp.eq.s32.totalorder %s40, 0
      %s43 = sadd.s32 %s42, 1
      %s44 = scalar_select %p41, %s42, %s43
      %p47 = pneg %p41
      %p48 = scmp.eq.s32.totalorder %s18, 1
      %p49 = por %p47, %p48
      %p50 = scmp.ne.s32.totalorder %s42, %s45
      %p51 = scmp.eq.s32.totalorder %s18, 0
      %p52 = por %p50, %p51
      %p53 = scmp.ne.s32.totalorder %s42, %s45
      %p54 = scmp.eq.s32.totalorder %s23, 1
      %p55 = por %p53, %p54
      %p56 = scmp.ne.s32.totalorder %s45, %s46
      %p57 = scmp.eq.s32.totalorder %s23, 0
      %p58 = por %p56, %p57
      %p59 = scmp.ne.s32.totalorder %s45, %s46
      %p60 = scmp.eq.s32.totalorder %s24, 1
      %p61 = por %p59, %p60
      %p63 = scmp.ne.s32.totalorder %s46, %s62
      %p64 = scmp.eq.s32.totalorder %s24, 0
      %p65 = por %p63, %p64
      %s66 = sadd.s32 %s25, %s26
      %s67 = sadd.s32 %s37, %s33
      %s68 = ssub.s32 %s66, %s67
      %p69 = scmp.eq.s32.totalorder %s68, 0
      %s71 = sadd.s32 %s70, 1
      %s72 = scalar_select %p69, %s70, %s71
      %p75 = pneg %p69
      %p76 = scmp.eq.s32.totalorder %s18, 1
      %p77 = por %p75, %p76
      %p78 = scmp.ne.s32.totalorder %s70, %s73
      %p79 = scmp.eq.s32.totalorder %s18, 0
      %p80 = por %p78, %p79
      %p81 = scmp.ne.s32.totalorder %s70, %s73
      %p82 = scmp.eq.s32.totalorder %s23, 1
      %p83 = por %p81, %p82
      %p84 = scmp.ne.s32.totalorder %s73, %s74
      %p85 = scmp.eq.s32.totalorder %s23, 0
      %p86 = por %p84, %p85
      %p87 = scmp.ne.s32.totalorder %s73, %s74
      %p88 = scmp.eq.s32.totalorder %s24, 1
      %p89 = por %p87, %p88
      %p91 = scmp.ne.s32.totalorder %s74, %s90
      %p92 = scmp.eq.s32.totalorder %s24, 0
      %p93 = por %p91, %p92
      %s95 = sadd.s32 %s94, 1
      %p98 = scmp.eq.s32.totalorder %s18, 1
      %p99 = scmp.ne.s32.totalorder %s94, %s96
      %p100 = scmp.eq.s32.totalorder %s18, 0
      %p101 = por %p99, %p100
      %p102 = scmp.ne.s32.totalorder %s94, %s96
      %p103 = scmp.eq.s32.totalorder %s23, 1
      %p104 = por %p102, %p103
      %p105 = scmp.ne.s32.totalorder %s96, %s97
      %p106 = scmp.eq.s32.totalorder %s23, 0
      %p107 = por %p105, %p106
      %p108 = scmp.ne.s32.totalorder %s96, %s97
      %p109 = scmp.eq.s32.totalorder %s24, 1
      %p110 = por %p108, %p109
      %p112 = scmp.ne.s32.totalorder %s97, %s111
      %p113 = scmp.eq.s32.totalorder %s24, 0
      %p114 = por %p112, %p113
      %s116 = sadd.s32 %s115, 1
      %p119 = scmp.eq.s32.totalorder %s18, 1
      %p120 = scmp.ne.s32.totalorder %s115, %s117
      %p121 = scmp.eq.s32.totalorder %s18, 0
      %p122 = por %p120, %p121
      %p123 = scmp.ne.s32.totalorder %s115, %s117
      %p124 = scmp.eq.s32.totalorder %s23, 1
      %p125 = por %p123, %p124
      %p126 = scmp.ne.s32.totalorder %s117, %s118
      %p127 = scmp.eq.s32.totalorder %s23, 0
      %p128 = por %p126, %p127
      %p129 = scmp.ne.s32.totalorder %s117, %s118
      %p130 = scmp.eq.s32.totalorder %s24, 1
      %p131 = por %p129, %p130
      %p133 = scmp.ne.s32.totalorder %s118, %s132
      %p134 = scmp.eq.s32.totalorder %s24, 0
      %p135 = por %p133, %p134
      %s137 = sadd.s32 %s136, 1
      %p140 = scmp.eq.s32.totalorder %s18, 1
      %p141 = scmp.ne.s32.totalorder %s136, %s138
      %p142 = scmp.eq.s32.totalorder %s18, 0
      %p143 = por %p141, %p142
      %p144 = scmp.ne.s32.totalorder %s136, %s138
      %p145 = scmp.eq.s32.totalorder %s23, 1
      %p146 = por %p144, %p145
      %p147 = scmp.ne.s32.totalorder %s138, %s139
      %p148 = scmp.eq.s32.totalorder %s23, 0
      %p149 = por %p147, %p148
      %p150 = scmp.ne.s32.totalorder %s138, %s139
      %p151 = scmp.eq.s32.totalorder %s24, 1
      %p152 = por %p150, %p151
      %p154 = scmp.ne.s32.totalorder %s139, %s153
      %p155 = scmp.eq.s32.totalorder %s24, 0
      %p156 = por %p154, %p155
      %s158 = sadd.s32 %s157, 1
      %p161 = scmp.eq.s32.totalorder %s18, 1
      %p162 = scmp.ne.s32.totalorder %s157, %s159
      %p163 = scmp.eq.s32.totalorder %s18, 0
      %p164 = por %p162, %p163
      %p165 = scmp.ne.s32.totalorder %s157, %s159
      %p166 = scmp.eq.s32.totalorder %s23, 1
      %p167 = por %p165, %p166
      %p168 = scmp.ne.s32.totalorder %s159, %s160
      %p169 = scmp.eq.s32.totalorder %s23, 0
      %p170 = por %p168, %p169
      %p171 = scmp.ne.s32.totalorder %s159, %s160
      %p172 = scmp.eq.s32.totalorder %s24, 1
      %p173 = por %p171, %p172
      %p175 = scmp.ne.s32.totalorder %s160, %s174
      %p176 = scmp.eq.s32.totalorder %s24, 0
      %p177 = por %p175, %p176
      %s179 = sadd.s32 %s178, 1
      %p182 = scmp.eq.s32.totalorder %s18, 1
      %p183 = scmp.ne.s32.totalorder %s178, %s180
      %p184 = scmp.eq.s32.totalorder %s18, 0
      %p185 = por %p183, %p184
      %p186 = scmp.ne.s32.totalorder %s178, %s180
      %p187 = scmp.eq.s32.totalorder %s23, 1
      %p188 = por %p186, %p187
      %p189 = scmp.ne.s32.totalorder %s180, %s181
      %p190 = scmp.eq.s32.totalorder %s23, 0
      %p191 = por %p189, %p190
      %p192 = scmp.ne.s32.totalorder %s180, %s181
      %p193 = scmp.eq.s32.totalorder %s24, 1
      %p194 = por %p192, %p193
      %p196 = scmp.ne.s32.totalorder %s181, %s195
      %p197 = scmp.eq.s32.totalorder %s24, 0
      %p198 = por %p196, %p197
      %s200 = sadd.s32 %s199, 1
      %p203 = scmp.eq.s32.totalorder %s18, 1
      %p204 = scmp.ne.s32.totalorder %s199, %s201
      %p205 = scmp.eq.s32.totalorder %s18, 0
      %p206 = por %p204, %p205
      %p207 = scmp.ne.s32.totalorder %s199, %s201
      %p208 = scmp.eq.s32.totalorder %s23, 1
      %p209 = por %p207, %p208
      %p210 = scmp.ne.s32.totalorder %s201, %s202
      %p211 = scmp.eq.s32.totalorder %s23, 0
      %p212 = por %p210, %p211
      %p213 = scmp.ne.s32.totalorder %s201, %s202
      %p214 = scmp.eq.s32.totalorder %s24, 1
      %p215 = por %p213, %p214
      %p217 = scmp.ne.s32.totalorder %s202, %s216
      %p218 = scmp.eq.s32.totalorder %s24, 0
      %p219 = por %p217, %p218
      %s221 = sadd.s32 %s220, 1
      %p224 = scmp.eq.s32.totalorder %s18, 1
      %p225 = scmp.ne.s32.totalorder %s220, %s222
      %p226 = scmp.eq.s32.totalorder %s18, 0
      %p227 = por %p225, %p226
      %p228 = scmp.ne.s32.totalorder %s220, %s222
      %p229 = scmp.eq.s32.totalorder %s23, 1
      %p230 = por %p228, %p229
      %p231 = scmp.ne.s32.totalorder %s222, %s223
      %p232 = scmp.eq.s32.totalorder %s23, 0
      %p233 = por %p231, %p232
      %p234 = scmp.ne.s32.totalorder %s222, %s223
      %p235 = scmp.eq.s32.totalorder %s24, 1
      %p236 = por %p234, %p235
      %p238 = scmp.ne.s32.totalorder %s223, %s237
      %p239 = scmp.eq.s32.totalorder %s24, 0
      %p240 = por %p238, %p239
      %s241 = ssub.s32 %s25, %s37
      %p242 = scmp.eq.s32.totalorder %s241, 0
      %s244 = sadd.s32 %s243, 1
      %s245 = scalar_select %p242, %s243, %s244
      %p248 = pneg %p242
      %p249 = scmp.eq.s32.totalorder %s18, 1
      %p250 = por %p248, %p249
      %p251 = scmp.ne.s32.totalorder %s243, %s246
      %p252 = scmp.eq.s32.totalorder %s18, 0
      %p253 = por %p251, %p252
      %p254 = scmp.ne.s32.totalorder %s243, %s246
      %p255 = scmp.eq.s32.totalorder %s23, 1
      %p256 = por %p254, %p255
      %p257 = scmp.ne.s32.totalorder %s246, %s247
      %p258 = scmp.eq.s32.totalorder %s23, 0
      %p259 = por %p257, %p258
      %p260 = scmp.ne.s32.totalorder %s246, %s247
      %p261 = scmp.eq.s32.totalorder %s24, 1
      %p262 = por %p260, %p261
      %p264 = scmp.ne.s32.totalorder %s247, %s263
      %p265 = scmp.eq.s32.totalorder %s24, 0
      %p266 = por %p264, %p265
      %p267 = scmp.le.s32.totalorder 1, %s18
      %p268 = scmp.lt.s32.totalorder %s18, 3
      %p269 = pnand %p267, %p268
      %p270 = pneg %p269
      // Predicated region
      $region9: #{tpu_custom_call.1} parent=5 // pred_check
        _
      $region10: #{tpu_custom_call.1} parent=5 // pred_check_branch
        %272 = sbr.rel (%p269) target = $region12
      $region11: #{tpu_custom_call.1} parent=5 // pred_region
        %s273 = ssub.s32 %s18, 1
        // Predicated region
        $region13: #{tpu_custom_call.1} parent=11 // pred_check
          %p274 = pneg %p107
        $region14: #{tpu_custom_call.1} parent=11 // pred_check_branch
          %276 = sbr.rel (%p274) target = $region16
        $region15: #{tpu_custom_call.1} parent=11 // pred_region
          _
        $region16: #{tpu_custom_call.1} parent=11 // pred_fallthru
          _
        // Predicated region
        $region17: #{tpu_custom_call.1} parent=11 // pred_check
          %p277 = pneg %p128
        $region18: #{tpu_custom_call.1} parent=11 // pred_check_branch
          %279 = sbr.rel (%p277) target = $region20
        $region19: #{tpu_custom_call.1} parent=11 // pred_region
          _
        $region20: #{tpu_custom_call.1} parent=11 // pred_fallthru
          _
        // Predicated region
        $region21: #{tpu_custom_call.1} parent=11 // pred_check
          %p280 = pneg %p149
        $region22: #{tpu_custom_call.1} parent=11 // pred_check_branch
          %282 = sbr.rel (%p280) target = $region24
        $region23: #{tpu_custom_call.1} parent=11 // pred_region
          _
        $region24: #{tpu_custom_call.1} parent=11 // pred_fallthru
          _
        // Predicated region
        $region25: #{tpu_custom_call.1} parent=11 // pred_check
          %p283 = pneg %p170
        $region26: #{tpu_custom_call.1} parent=11 // pred_check_branch
          %285 = sbr.rel (%p283) target = $region28
        $region27: #{tpu_custom_call.1} parent=11 // pred_region
          _
        $region28: #{tpu_custom_call.1} parent=11 // pred_fallthru
          _
        // Predicated region
        $region29: #{tpu_custom_call.1} parent=11 // pred_check
          %p286 = pneg %p191
        $region30: #{tpu_custom_call.1} parent=11 // pred_check_branch
          %288 = sbr.rel (%p286) target = $region32
        $region31: #{tpu_custom_call.1} parent=11 // pred_region
          _
        $region32: #{tpu_custom_call.1} parent=11 // pred_fallthru
          _
        // Predicated region
        $region33: #{tpu_custom_call.1} parent=11 // pred_check
          %p289 = pneg %p212
        $region34: #{tpu_custom_call.1} parent=11 // pred_check_branch
          %291 = sbr.rel (%p289) target = $region36
        $region35: #{tpu_custom_call.1} parent=11 // pred_region
          _
        $region36: #{tpu_custom_call.1} parent=11 // pred_fallthru
          _
        // Predicated region
        $region37: #{tpu_custom_call.1} parent=11 // pred_check
          %p292 = pneg %p233
        $region38: #{tpu_custom_call.1} parent=11 // pred_check_branch
          %294 = sbr.rel (%p292) target = $region40
        $region39: #{tpu_custom_call.1} parent=11 // pred_region
          _
        $region40: #{tpu_custom_call.1} parent=11 // pred_fallthru
          _
      $region12: #{tpu_custom_call.1} parent=5 // pred_fallthru
        _
      %p295 = scmp.lt.s32.totalorder %s18, 2
      // Predicated region
      $region41: #{tpu_custom_call.1} parent=5 // pred_check
        %p296 = pneg %p295
      $region42: #{tpu_custom_call.1} parent=5 // pred_check_branch
        %298 = sbr.rel (%p296) target = $region44
      $region43: #{tpu_custom_call.1} parent=5 // pred_region
        // Predicated region
        $region45: #{tpu_custom_call.1} parent=43 // pred_check
          %p299 = pneg %p52
        $region46: #{tpu_custom_call.1} parent=43 // pred_check_branch
          %301 = sbr.rel (%p299) target = $region48
        $region47: #{tpu_custom_call.1} parent=43 // pred_region
          %s302 = sadd.s32 %s25, %s26
          %s303 = smul.u32 2, %s302
          %p304 = scmp.lt.s32.totalorder %s303, 3
          %s305 = scalar_select %p304, %s303, 3
          %s306 = smul.addr %s305, 8
          %s307 = scalar_lea.vmem %s0, %s306
          %s308 = sadd.s32 %s25, %s26
          %s309 = smul.u32 2, %s308
        $region48: #{tpu_custom_call.1} parent=43 // pred_fallthru
          _
        // Predicated region
        $region49: #{tpu_custom_call.1} parent=43 // pred_check
          %p310 = pneg %p80
        $region50: #{tpu_custom_call.1} parent=43 // pred_check_branch
          %312 = sbr.rel (%p310) target = $region52
        $region51: #{tpu_custom_call.1} parent=43 // pred_region
          %s313 = sadd.s32 %s25, %s26
          %s314 = smul.u32 2, %s313
          %p315 = scmp.lt.s32.totalorder %s314, 3
          %s316 = scalar_select %p315, %s314, 3
          %s317 = smul.addr %s316, 8
          %s318 = scalar_lea.vmem %s1, %s317
          %s319 = sadd.s32 %s25, %s26
          %s320 = smul.u32 2, %s319
        $region52: #{tpu_custom_call.1} parent=43 // pred_fallthru
          _
      $region44: #{tpu_custom_call.1} parent=5 // pred_fallthru
        _
      %p321 = scmp.le.s32.totalorder 1, %s18
      %p322 = scmp.lt.s32.totalorder %s18, 3
      %p323 = pnand %p321, %p322
      %p324 = pneg %p323
      // Predicated region
      $region53: #{tpu_custom_call.1} parent=5 // pred_check
        _
      $region54: #{tpu_custom_call.1} parent=5 // pred_check_branch
        %326 = sbr.rel (%p323) target = $region56
      $region55: #{tpu_custom_call.1} parent=5 // pred_region
        %s327 = ssub.s32 %s18, 1
        %s328 = sadd.s32 %s27, %s28
        %s329 = smul.u32 2, %s328
        %p330 = scmp.lt.s32.totalorder %s329, 3
        %s331 = scalar_select %p330, %s329, 3
        %s332 = smul.addr %s331, 8
        %s333 = scalar_lea.vmem %s0, %s332
        %p334 = pneg %p58
        %p335 = pneg %p55
        %s336 = sadd.s32 %s27, %s28
        %s337 = smul.u32 2, %s336
        %p338 = scmp.lt.s32.totalorder %s337, 3
        %s339 = scalar_select %p338, %s337, 3
        %s340 = smul.addr %s339, 8
        %s341 = scalar_lea.vmem %s1, %s340
        %p342 = pneg %p86
        %p343 = pneg %p83
        %p344 = pneg %p107
        %p345 = pneg %p104
        %p346 = pneg %p128
        %p347 = pneg %p125
        %p348 = pneg %p149
        %p349 = pneg %p146
        %p350 = pneg %p170
        %p351 = pneg %p167
        %p352 = pneg %p191
        %p353 = pneg %p188
        %p354 = pneg %p212
        %p355 = pneg %p209
        %p356 = pneg %p233
        %p357 = pneg %p230
        %p358 = pneg %p259
        %p359 = pneg %p256
        %s360 = sand.u32 %s246, 1
        %s361 = scalar_lea.sflag [#allocation3], %s360
        %s362 = sand.u32 %s246, 1
        %s363 = smul.addr %s362, 2
        %s364 = scalar_lea.vmem [#allocation2], %s363
        %s365 = sadd.s32 %s27, %s28
        %s366 = smul.u32 2, %s365
        %p367 = scmp.lt.s32.totalorder %s366, 3
        %s368 = scalar_select %p367, %s366, 3
        %s369 = smul.addr %s368, 8
        %s370 = scalar_lea.vmem %s0, %s369
        %s371 = sadd.s32 %s27, %s28
        %s372 = smul.u32 2, %s371
        %s373 = sadd.s32 %s27, %s28
        %s374 = smul.u32 2, %s373
        %p375 = scmp.lt.s32.totalorder %s374, 3
        %s376 = scalar_select %p375, %s374, 3
        %s377 = smul.addr %s376, 8
        %s378 = scalar_lea.vmem %s1, %s377
        %s379 = sadd.s32 %s27, %s28
        %s380 = smul.u32 2, %s379
        %p382 = scmp.eq.s32.totalorder %s28, 0
        // Predicated region
        $region57: #{tpu_custom_call.1} parent=55 // pred_check
          %p383 = pneg %p382
        $region58: #{tpu_custom_call.1} parent=55 // pred_check_branch
          %385 = sbr.rel (%p383) target = $region60
        $region59: #{tpu_custom_call.1} parent=55 // pred_region
          %vm386 = vcmask 123904
          %387 = vst.msk [vmem:[%s364] sm:$0x3] %vm386, 0.0
        $region60: #{tpu_custom_call.1} parent=55 // pred_fallthru
          _
        %v388 = vlaneseq
        %v389 = vand.u32 %v388, 127
        %v390 = vadd.s32 %v389, 128
        %v391 = vand.u32 %v389, 15
        %v392 = vand.u32 %v390, 15
        %v393 = vcvt.s32.f32 %v391
        %v394 = vcvt.s32.f32 %v392
        %v395 = vld [vmem:[%s7] sm:$0xff]
        %v396 = vld [vmem:[%s7 + $0x8] sm:$0xff]
        %v397 = vld [vmem:[%s7 + $0x10] sm:$0xff]
        %v398 = vld [vmem:[%s7 + $0x18] sm:$0xff]
        %v399 = vld [vmem:[%s8] sm:$0xff]
        %v400 = vld [vmem:[%s8 + $0x8] sm:$0xff]
        %v401 = vld [vmem:[%s8 + $0x10] sm:$0xff]
        %v402 = vld [vmem:[%s8 + $0x18] sm:$0xff]
        %v403 = vld [vmem:[%s8 + $0x20] sm:$0xff]
        %v404 = vld [vmem:[%s8 + $0x28] sm:$0xff]
        %v405 = vld [vmem:[%s8 + $0x30] sm:$0xff]
        %v406 = vld [vmem:[%s8 + $0x38] sm:$0xff]
        %v407 = vld [vmem:[%s8 + $0x40] sm:$0xff]
        %v408 = vld [vmem:[%s8 + $0x48] sm:$0xff]
        %v409 = vld [vmem:[%s8 + $0x50] sm:$0xff]
        %v410 = vld [vmem:[%s8 + $0x58] sm:$0xff]
        %v411 = vld [vmem:[%s8 + $0x60] sm:$0xff]
        %v412 = vld [vmem:[%s8 + $0x68] sm:$0xff]
        %v413 = vld [vmem:[%s8 + $0x70] sm:$0xff]
        %v414 = vld [vmem:[%s8 + $0x78] sm:$0xff]
        %v415 = vld [vmem:[%s8 + $0x80] sm:$0xff]
        %v416 = vld [vmem:[%s8 + $0x88] sm:$0xff]
        %v417 = vld [vmem:[%s8 + $0x90] sm:$0xff]
        %v418 = vld [vmem:[%s8 + $0x98] sm:$0xff]
        %v419 = vld [vmem:[%s8 + $0xa0] sm:$0xff]
        %v420 = vld [vmem:[%s8 + $0xa8] sm:$0xff]
        %v421 = vld [vmem:[%s8 + $0xb0] sm:$0xff]
        %v422 = vld [vmem:[%s8 + $0xb8] sm:$0xff]
        %v423 = vld [vmem:[%s8 + $0xc0] sm:$0xff]
        %v424 = vld [vmem:[%s8 + $0xc8] sm:$0xff]
        %v425 = vld [vmem:[%s8 + $0xd0] sm:$0xff]
        %v426 = vld [vmem:[%s8 + $0xd8] sm:$0xff]
        %v427 = vld [vmem:[%s8 + $0xe0] sm:$0xff]
        %v428 = vld [vmem:[%s8 + $0xe8] sm:$0xff]
        %v429 = vld [vmem:[%s8 + $0xf0] sm:$0xff]
        %v430 = vld [vmem:[%s8 + $0xf8] sm:$0xff]
        %v431 = vld [vmem:[%s370] sm:$0xff]
        %v432 = vld [vmem:[%s370 + $0x8] sm:$0xff]
        %v433 = vcvt.s32.f32 %v431
        %v434 = vcvt.s32.f32 %v432
        %vm435 = vcmask 130048
        %v437 = vsel %vm435, %v433, 0
        %v440 = vsel %vm435, %v434, 0
        %442 = vmatprep.subr.mxu0 %v396
        %443 = vmatpush1.msra.mxu0 %v395
        %444 = vmatprep.subr.mxu0 %v398
        %445 = vmatpush1.msra.mxu0 %v397
        %446 = vmatprep.subr.mxu0 0.0
        %447 = vmatpush1.msra.mxu0 0.0
        %448 = vmatprep.subr.mxu0 0.0
        %449 = vmatpush1.msra.mxu0 0.0
        %450 = vmatprep.subr.mxu0 0.0
        %451 = vmatpush1.msra.mxu0 0.0
        %452 = vmatprep.subr.mxu0 0.0
        %453 = vmatpush1.msra.mxu0 0.0
        %454 = vmatprep.subr.mxu0 0.0
        %455 = vmatpush1.msra.mxu0 0.0
        %456 = vmatprep.subr.mxu0 0.0
        %457 = vmatpush1.msra.mxu0 0.0
        %458 = vmatprep.subr.mxu0 0.0
        %459 = vmatpush1.msra.mxu0 0.0
        %460 = vmatprep.subr.mxu0 0.0
        %461 = vmatpush1.msra.mxu0 0.0
        %462 = vmatprep.subr.mxu0 0.0
        %463 = vmatpush1.msra.mxu0 0.0
        %464 = vmatprep.subr.mxu0 0.0
        %465 = vmatpush1.msra.mxu0 0.0
        %466 = vmatprep.subr.mxu0 0.0
        %467 = vmatpush1.msra.mxu0 0.0
        %468 = vmatprep.subr.mxu0 0.0
        %469 = vmatpush1.msra.mxu0 0.0
        %470 = vmatprep.subr.mxu0 0.0
        %471 = vmatpush1.msra.mxu0 0.0
        %472 = vmatprep.subr.mxu0 0.0
        %473 = vmatpush1.msra.mxu0 0.0
        %474 = vmatprep.subr.mxu0 0.0
        %475 = vmatpush1.msra.mxu0 0.0
        %476 = vmatprep.subr.mxu0 0.0
        %477 = vmatpush1.msra.mxu0 0.0
        %478 = vmatprep.subr.mxu0 0.0
        %479 = vmatpush1.msra.mxu0 0.0
        %480 = vmatprep.subr.mxu0 0.0
        %481 = vmatpush1.msra.mxu0 0.0
        %482 = vmatprep.subr.mxu0 0.0
        %483 = vmatpush1.msra.mxu0 0.0
        %484 = vmatprep.subr.mxu0 0.0
        %485 = vmatpush1.msra.mxu0 0.0
        %486 = vmatprep.subr.mxu0 0.0
        %487 = vmatpush1.msra.mxu0 0.0
        %488 = vmatprep.subr.mxu0 0.0
        %489 = vmatpush1.msra.mxu0 0.0
        %490 = vmatprep.subr.mxu0 0.0
        %491 = vmatpush1.msra.mxu0 0.0
        %492 = vmatprep.subr.mxu0 0.0
        %493 = vmatpush1.msra.mxu0 0.0
        %494 = vmatprep.subr.mxu0 0.0
        %495 = vmatpush1.msra.mxu0 0.0
        %496 = vmatprep.subr.mxu0 0.0
        %497 = vmatpush1.msra.mxu0 0.0
        %498 = vmatprep.subr.mxu0 0.0
        %499 = vmatpush1.msra.mxu0 0.0
        %500 = vmatprep.subr.mxu0 0.0
        %501 = vmatpush1.msra.mxu0 0.0
        %502 = vmatprep.subr.mxu0 0.0
        %503 = vmatpush1.msra.mxu0 0.0
        %504 = vmatprep.subr.mxu0 0.0
        %505 = vmatpush1.msra.mxu0 0.0
        %506 = vmatprep.mubr.f32.mxu0 0.0
        %507 = vmatmul.mubr.f32.gmra.mrb[0].mxu0 %v437
        %v508 = vpop.f32.mrb[0].mxu0
        %v509 = vadd.f32 0.0, %v508
        %v510 = vpop.f32.mrb[0].mxu0
        %v511 = vadd.f32 0.0, %v510
        %512 = vmatprep.mubr.f32.mxu0 0.0
        %513 = vmatmul.mubr.f32.gmra.mrb[0].mxu0 %v440
        %v514 = vpop.f32.mrb[0].mxu0
        %v515 = vadd.f32 0.0, %v514
        %v516 = vpop.f32.mrb[0].mxu0
        %v517 = vadd.f32 0.0, %v516
        %518 = vdwg.mxu0
        %vm519 = vcmp.eq.f32.partialorder %v509, %v393
        %vm520 = vcmp.eq.f32.partialorder %v511, %v394
        %vm521 = vcmp.eq.f32.partialorder %v515, %v393
        %vm522 = vcmp.eq.f32.partialorder %v517, %v394
        %v523 = vsel %vm519, 1, 0
        %v524 = vsel %vm520, 1, 0
        %v525 = vsel %vm521, 1, 0
        %v526 = vsel %vm522, 1, 0
        %v527 = vcvt.s32.f32 %v523
        %v528 = vcvt.s32.f32 %v524
        %v529 = vcvt.s32.f32 %v525
        %v530 = vcvt.s32.f32 %v526
        %v531 = vld [vmem:[%s2] sm:$0xff]
        %v532 = vld [vmem:[%s2 + $0x8] sm:$0xff]
        %v533 = vld [vmem:[%s2 + $0x10] sm:$0xff]
        %v534 = vld [vmem:[%s2 + $0x18] sm:$0xff]
        %v535 = vld [vmem:[%s2 + $0x20] sm:$0xff]
        %v536 = vld [vmem:[%s2 + $0x28] sm:$0xff]
        %v537 = vld [vmem:[%s2 + $0x30] sm:$0xff]
        %v538 = vld [vmem:[%s2 + $0x38] sm:$0xff]
        %v539 = vld [vmem:[%s2 + $0x40] sm:$0xff]
        %v540 = vld [vmem:[%s2 + $0x48] sm:$0xff]
        %v541 = vld [vmem:[%s2 + $0x50] sm:$0xff]
        %v542 = vld [vmem:[%s2 + $0x58] sm:$0xff]
        %v543 = vld [vmem:[%s2 + $0x60] sm:$0xff]
        %v544 = vld [vmem:[%s2 + $0x68] sm:$0xff]
        %v545 = vld [vmem:[%s2 + $0x70] sm:$0xff]
        %v546 = vld [vmem:[%s2 + $0x78] sm:$0xff]
        %v547 = vld [vmem:[%s2 + $0x80] sm:$0xff]
        %v548 = vld [vmem:[%s2 + $0x88] sm:$0xff]
        %v549 = vld [vmem:[%s2 + $0x90] sm:$0xff]
        %v550 = vld [vmem:[%s2 + $0x98] sm:$0xff]
        %v551 = vld [vmem:[%s2 + $0xa0] sm:$0xff]
        %v552 = vld [vmem:[%s2 + $0xa8] sm:$0xff]
        %v553 = vld [vmem:[%s2 + $0xb0] sm:$0xff]
        %v554 = vld [vmem:[%s2 + $0xb8] sm:$0xff]
        %v555 = vld [vmem:[%s2 + $0xc0] sm:$0xff]
        %v556 = vld [vmem:[%s2 + $0xc8] sm:$0xff]
        %v557 = vld [vmem:[%s2 + $0xd0] sm:$0xff]
        %v558 = vld [vmem:[%s2 + $0xd8] sm:$0xff]
        %v559 = vld [vmem:[%s2 + $0xe0] sm:$0xff]
        %v560 = vld [vmem:[%s2 + $0xe8] sm:$0xff]
        %v561 = vld [vmem:[%s2 + $0xf0] sm:$0xff]
        %v562 = vld [vmem:[%s2 + $0xf8] sm:$0xff]
        %563 = vmatprep.subr.mxu0 0.0
        %564 = vmatpush1.msra.mxu0 %v531
        %565 = vmatprep.subr.mxu0 0.0
        %566 = vmatpush1.msra.mxu0 %v532
        %567 = vmatprep.subr.mxu0 0.0
        %568 = vmatpush1.msra.mxu0 %v533
        %569 = vmatprep.subr.mxu0 0.0
        %570 = vmatpush1.msra.mxu0 %v534
        %571 = vmatprep.subr.mxu0 0.0
        %572 = vmatpush1.msra.mxu0 %v535
        %573 = vmatprep.subr.mxu0 0.0
        %574 = vmatpush1.msra.mxu0 %v536
        %575 = vmatprep.subr.mxu0 0.0
        %576 = vmatpush1.msra.mxu0 %v537
        %577 = vmatprep.subr.mxu0 0.0
        %578 = vmatpush1.msra.mxu0 %v538
        %579 = vmatprep.subr.mxu0 0.0
        %580 = vmatpush1.msra.mxu0 %v539
        %581 = vmatprep.subr.mxu0 0.0
        %582 = vmatpush1.msra.mxu0 %v540
        %583 = vmatprep.subr.mxu0 0.0
        %584 = vmatpush1.msra.mxu0 %v541
        %585 = vmatprep.subr.mxu0 0.0
        %586 = vmatpush1.msra.mxu0 %v542
        %587 = vmatprep.subr.mxu0 0.0
        %588 = vmatpush1.msra.mxu0 %v543
        %589 = vmatprep.subr.mxu0 0.0
        %590 = vmatpush1.msra.mxu0 %v544
        %591 = vmatprep.subr.mxu0 0.0
        %592 = vmatpush1.msra.mxu0 %v545
        %593 = vmatprep.subr.mxu0 0.0
        %594 = vmatpush1.msra.mxu0 %v546
        %595 = vmatprep.subr.mxu0 0.0
        %596 = vmatpush1.msra.mxu0 %v547
        %597 = vmatprep.subr.mxu0 0.0
        %598 = vmatpush1.msra.mxu0 %v548
        %599 = vmatprep.subr.mxu0 0.0
        %600 = vmatpush1.msra.mxu0 %v549
        %601 = vmatprep.subr.mxu0 0.0
        %602 = vmatpush1.msra.mxu0 %v550
        %603 = vmatprep.subr.mxu0 0.0
        %604 = vmatpush1.msra.mxu0 %v551
        %605 = vmatprep.subr.mxu0 0.0
        %606 = vmatpush1.msra.mxu0 %v552
        %607 = vmatprep.subr.mxu0 0.0
        %608 = vmatpush1.msra.mxu0 %v553
        %609 = vmatprep.subr.mxu0 0.0
        %610 = vmatpush1.msra.mxu0 %v554
        %611 = vmatprep.subr.mxu0 0.0
        %612 = vmatpush1.msra.mxu0 %v555
        %613 = vmatprep.subr.mxu0 0.0
        %614 = vmatpush1.msra.mxu0 %v556
        %615 = vmatprep.subr.mxu0 0.0
        %616 = vmatpush1.msra.mxu0 %v557
        %617 = vmatprep.subr.mxu0 0.0
        %618 = vmatpush1.msra.mxu0 %v558
        %619 = vmatprep.subr.mxu0 0.0
        %620 = vmatpush1.msra.mxu0 %v559
        %621 = vmatprep.subr.mxu0 0.0
        %622 = vmatpush1.msra.mxu0 %v560
        %623 = vmatprep.subr.mxu0 0.0
        %624 = vmatpush1.msra.mxu0 %v561
        %625 = vmatprep.subr.mxu0 0.0
        %626 = vmatpush1.msra.mxu0 %v562
        %627 = vmatprep.mubr.f32.mxu0 %v528
        %628 = vmatmul.mubr.f32.gmra.mrb[0].mxu0 %v527
        %v629 = vpop.f32.mrb[0].mxu0
        %v630 = vadd.f32 0.0, %v629
        %v631 = vpop.f32.mrb[0].mxu0
        %632 = vmatprep.mubr.f32.mxu0 %v530
        %633 = vmatmul.mubr.f32.gmra.mrb[0].mxu0 %v529
        %v634 = vpop.f32.mrb[0].mxu0
        %v635 = vadd.f32 0.0, %v634
        %v636 = vpop.f32.mrb[0].mxu0
        %637 = vdwg.mxu0
        %v638 = vpack.c.bf16 %v635, %v630
        %v639 = vld [vmem:[%s3] sm:$0xf]
        %v640 = vld [vmem:[%s3 + $0x4] sm:$0xf]
        %v641 = vld [vmem:[%s3 + $0x8] sm:$0xf]
        %v642 = vld [vmem:[%s3 + $0xc] sm:$0xf]
        %v643 = vld [vmem:[%s4] sm:$0x1]
        %v645 = vlaneseq
        %v646 = vshrl.u32 %v645, 7
        %v647 = vsub.s32 0, %v646
        %v648 = vrot.slane %v643, %v647
        %v654 = vunpack.c.l.b16 %v639
        %v655 = vunpack.c.l.b16 %v640
        %v656 = vunpack.c.l.b16 %v641
        %v657 = vunpack.c.l.b16 %v642
        %v658 = vpack.c.b16 %v655, %v654
        %v659 = vpack.c.b16 %v657, %v656
        %vm662 = vcmask 261120
        %v664 = vsel %vm662, %v638, 0
        %666 = vmatprep.subr.bf16.mxu0 0
        %667 = vmatpush1.bf16.msra.mxu0 %v658
        %668 = vmatprep.subr.bf16.mxu0 0
        %669 = vmatpush1.bf16.msra.mxu0 %v659
        %670 = vmatprep.subr.bf16.mxu0 0
        %671 = vmatpush1.bf16.msra.mxu0 0
        %672 = vmatprep.subr.bf16.mxu0 0
        %673 = vmatpush1.bf16.msra.mxu0 0
        %674 = vmatprep.subr.bf16.mxu0 0
        %675 = vmatpush1.bf16.msra.mxu0 0
        %676 = vmatprep.subr.bf16.mxu0 0
        %677 = vmatpush1.bf16.msra.mxu0 0
        %678 = vmatprep.subr.bf16.mxu0 0
        %679 = vmatpush1.bf16.msra.mxu0 0
        %680 = vmatprep.subr.bf16.mxu0 0
        %681 = vmatpush1.bf16.msra.mxu0 0
        %682 = vmatprep.subr.bf16.mxu0 0
        %683 = vmatpush1.bf16.msra.mxu0 0
        %684 = vmatprep.subr.bf16.mxu0 0
        %685 = vmatpush1.bf16.msra.mxu0 0
        %686 = vmatprep.subr.bf16.mxu0 0
        %687 = vmatpush1.bf16.msra.mxu0 0
        %688 = vmatprep.subr.bf16.mxu0 0
        %689 = vmatpush1.bf16.msra.mxu0 0
        %690 = vmatprep.subr.bf16.mxu0 0
        %691 = vmatpush1.bf16.msra.mxu0 0
        %692 = vmatprep.subr.bf16.mxu0 0
        %693 = vmatpush1.bf16.msra.mxu0 0
        %694 = vmatprep.subr.bf16.mxu0 0
        %695 = vmatpush1.bf16.msra.mxu0 0
        %696 = vmatprep.subr.bf16.mxu0 0
        %697 = vmatpush1.bf16.msra.mxu0 0
        %698 = vmatprep.mubr.bf16.mxu0 0
        %699 = vmatmul.mubr.bf16.gmra.mrb[0].mxu0 %v664
        %v700 = vpop.f32.mrb[0].mxu0
        %v701 = vadd.f32 %v648, %v700
        %v702 = vpop.f32.mrb[0].mxu0
        %v703 = vpop.f32.mrb[0].mxu0
        %v704 = vadd.f32 %v648, %v703
        %v705 = vpop.f32.mrb[0].mxu0
        %706 = vdwg.mxu0
        %v707 = vmax.f32 %v701, 0.0
        %v708 = vmax.f32 %v704, 0.0
        %v709 = vpack.c.bf16 %v708, %v707
        %v710 = vld [vmem:[%s5] sm:$0xff]
        %v711 = vld [vmem:[%s5 + $0x8] sm:$0xff]
        %v712 = vld [vmem:[%s5 + $0x10] sm:$0xff]
        %v713 = vld [vmem:[%s5 + $0x18] sm:$0xff]
        %v714 = vld [vmem:[%s6] sm:$0x3]
        %v716 = vlaneseq
        %v717 = vshrl.u32 %v716, 7
        %v718 = vsub.s32 0, %v717
        %v719 = vrot.slane %v714, %v718
        %v720 = vlaneseq
        %v721 = vshrl.u32 %v720, 7
        %v722 = vsub.s32 1, %v721
        %v723 = vrot.slane %v714, %v722
        %v730 = vunpack.c.l.b16 %v710
        %v731 = vunpack.c.h.b16 %v710
        %v732 = vunpack.c.l.b16 %v711
        %v733 = vunpack.c.h.b16 %v711
        %v734 = vunpack.c.l.b16 %v712
        %v735 = vunpack.c.h.b16 %v712
        %v736 = vunpack.c.l.b16 %v713
        %v737 = vunpack.c.h.b16 %v713
        %v738 = vpack.c.b16 %v732, %v730
        %v739 = vpack.c.b16 %v733, %v731
        %v740 = vpack.c.b16 %v736, %v734
        %v741 = vpack.c.b16 %v737, %v735
        %v747 = vsel %vm662, %v709, 0
        %749 = vmatprep.subr.bf16.mxu0 %v739
        %750 = vmatpush1.bf16.msra.mxu0 %v738
        %751 = vmatprep.subr.bf16.mxu0 %v741
        %752 = vmatpush1.bf16.msra.mxu0 %v740
        %753 = vmatprep.subr.bf16.mxu0 0
        %754 = vmatpush1.bf16.msra.mxu0 0
        %755 = vmatprep.subr.bf16.mxu0 0
        %756 = vmatpush1.bf16.msra.mxu0 0
        %757 = vmatprep.subr.bf16.mxu0 0
        %758 = vmatpush1.bf16.msra.mxu0 0
        %759 = vmatprep.subr.bf16.mxu0 0
        %760 = vmatpush1.bf16.msra.mxu0 0
        %761 = vmatprep.subr.bf16.mxu0 0
        %762 = vmatpush1.bf16.msra.mxu0 0
        %763 = vmatprep.subr.bf16.mxu0 0
        %764 = vmatpush1.bf16.msra.mxu0 0
        %765 = vmatprep.subr.bf16.mxu0 0
        %766 = vmatpush1.bf16.msra.mxu0 0
        %767 = vmatprep.subr.bf16.mxu0 0
        %768 = vmatpush1.bf16.msra.mxu0 0
        %769 = vmatprep.subr.bf16.mxu0 0
        %770 = vmatpush1.bf16.msra.mxu0 0
        %771 = vmatprep.subr.bf16.mxu0 0
        %772 = vmatpush1.bf16.msra.mxu0 0
        %773 = vmatprep.subr.bf16.mxu0 0
        %774 = vmatpush1.bf16.msra.mxu0 0
        %775 = vmatprep.subr.bf16.mxu0 0
        %776 = vmatpush1.bf16.msra.mxu0 0
        %777 = vmatprep.subr.bf16.mxu0 0
        %778 = vmatpush1.bf16.msra.mxu0 0
        %779 = vmatprep.subr.bf16.mxu0 0
        %780 = vmatpush1.bf16.msra.mxu0 0
        %781 = vmatprep.mubr.bf16.mxu0 0
        %782 = vmatmul.mubr.bf16.gmra.mrb[0].mxu0 %v747
        %v783 = vpop.f32.mrb[0].mxu0
        %v784 = vadd.f32 %v719, %v783
        %v785 = vpop.f32.mrb[0].mxu0
        %v786 = vadd.f32 %v723, %v785
        %v787 = vpop.f32.mrb[0].mxu0
        %v788 = vadd.f32 %v719, %v787
        %v789 = vpop.f32.mrb[0].mxu0
        %v790 = vadd.f32 %v723, %v789
        %791 = vdwg.mxu0
        %v792 = vld [vmem:[%s378] sm:$0xff]
        %v793 = vld [vmem:[%s378 + $0x8] sm:$0xff]
        %v794 = vcvt.s32.f32 %v792
        %v795 = vcvt.s32.f32 %v793
        %v797 = vsel %vm435, %v794, 0
        %v800 = vsel %vm435, %v795, 0
        %802 = vmatprep.subr.mxu0 %v396
        %803 = vmatpush1.msra.mxu0 %v395
        %804 = vmatprep.subr.mxu0 %v398
        %805 = vmatpush1.msra.mxu0 %v397
        %806 = vmatprep.subr.mxu0 0.0
        %807 = vmatpush1.msra.mxu0 0.0
        %808 = vmatprep.subr.mxu0 0.0
        %809 = vmatpush1.msra.mxu0 0.0
        %810 = vmatprep.subr.mxu0 0.0
        %811 = vmatpush1.msra.mxu0 0.0
        %812 = vmatprep.subr.mxu0 0.0
        %813 = vmatpush1.msra.mxu0 0.0
        %814 = vmatprep.subr.mxu0 0.0
        %815 = vmatpush1.msra.mxu0 0.0
        %816 = vmatprep.subr.mxu0 0.0
        %817 = vmatpush1.msra.mxu0 0.0
        %818 = vmatprep.subr.mxu0 0.0
        %819 = vmatpush1.msra.mxu0 0.0
        %820 = vmatprep.subr.mxu0 0.0
        %821 = vmatpush1.msra.mxu0 0.0
        %822 = vmatprep.subr.mxu0 0.0
        %823 = vmatpush1.msra.mxu0 0.0
        %824 = vmatprep.subr.mxu0 0.0
        %825 = vmatpush1.msra.mxu0 0.0
        %826 = vmatprep.subr.mxu0 0.0
        %827 = vmatpush1.msra.mxu0 0.0
        %828 = vmatprep.subr.mxu0 0.0
        %829 = vmatpush1.msra.mxu0 0.0
        %830 = vmatprep.subr.mxu0 0.0
        %831 = vmatpush1.msra.mxu0 0.0
        %832 = vmatprep.subr.mxu0 0.0
        %833 = vmatpush1.msra.mxu0 0.0
        %834 = vmatprep.subr.mxu0 0.0
        %835 = vmatpush1.msra.mxu0 0.0
        %836 = vmatprep.subr.mxu0 0.0
        %837 = vmatpush1.msra.mxu0 0.0
        %838 = vmatprep.subr.mxu0 0.0
        %839 = vmatpush1.msra.mxu0 0.0
        %840 = vmatprep.subr.mxu0 0.0
        %841 = vmatpush1.msra.mxu0 0.0
        %842 = vmatprep.subr.mxu0 0.0
        %843 = vmatpush1.msra.mxu0 0.0
        %844 = vmatprep.subr.mxu0 0.0
        %845 = vmatpush1.msra.mxu0 0.0
        %846 = vmatprep.subr.mxu0 0.0
        %847 = vmatpush1.msra.mxu0 0.0
        %848 = vmatprep.subr.mxu0 0.0
        %849 = vmatpush1.msra.mxu0 0.0
        %850 = vmatprep.subr.mxu0 0.0
        %851 = vmatpush1.msra.mxu0 0.0
        %852 = vmatprep.subr.mxu0 0.0
        %853 = vmatpush1.msra.mxu0 0.0
        %854 = vmatprep.subr.mxu0 0.0
        %855 = vmatpush1.msra.mxu0 0.0
        %856 = vmatprep.subr.mxu0 0.0
        %857 = vmatpush1.msra.mxu0 0.0
        %858 = vmatprep.subr.mxu0 0.0
        %859 = vmatpush1.msra.mxu0 0.0
        %860 = vmatprep.subr.mxu0 0.0
        %861 = vmatpush1.msra.mxu0 0.0
        %862 = vmatprep.subr.mxu0 0.0
        %863 = vmatpush1.msra.mxu0 0.0
        %864 = vmatprep.subr.mxu0 0.0
        %865 = vmatpush1.msra.mxu0 0.0
        %866 = vmatprep.mubr.f32.mxu0 0.0
        %867 = vmatmul.mubr.f32.gmra.mrb[0].mxu0 %v797
        %v868 = vpop.f32.mrb[0].mxu0
        %v869 = vadd.f32 0.0, %v868
        %v870 = vpop.f32.mrb[0].mxu0
        %v871 = vadd.f32 0.0, %v870
        %872 = vmatprep.mubr.f32.mxu0 0.0
        %873 = vmatmul.mubr.f32.gmra.mrb[0].mxu0 %v800
        %v874 = vpop.f32.mrb[0].mxu0
        %v875 = vadd.f32 0.0, %v874
        %v876 = vpop.f32.mrb[0].mxu0
        %v877 = vadd.f32 0.0, %v876
        %878 = vdwg.mxu0
        %vm879 = vcmp.eq.f32.partialorder %v869, %v393
        %vm880 = vcmp.eq.f32.partialorder %v871, %v394
        %vm881 = vcmp.eq.f32.partialorder %v875, %v393
        %vm882 = vcmp.eq.f32.partialorder %v877, %v394
        %v883 = vmax.f32 %v784, %v786
        %884 = vmax.xlane.f32.xlu0 %v883
        %v885 = vpop.xlane.xlu0 %884
        %v886 = vmax.f32 %v788, %v790
        %887 = vmax.xlane.f32.xlu0 %v886
        %v888 = vpop.xlane.xlu0 %887
        %v889 = vsub.f32 %v784, %v885
        %v890 = vsub.f32 %v786, %v885
        %v891 = vsub.f32 %v788, %v888
        %v892 = vsub.f32 %v790, %v888
        %v893 = vmul.f32 %v889, 1.442695
        %v894 = vpow.pop %v893
        %v895 = vmul.f32 %v890, 1.442695
        %v896 = vpow.pop %v895
        %v897 = vmul.f32 %v891, 1.442695
        %v898 = vpow.pop %v897
        %v899 = vmul.f32 %v892, 1.442695
        %v900 = vpow.pop %v899
        %901 = vmatprep.subr.mxu0 0.0
        %902 = vmatpush1.msra.mxu0 %v399
        %903 = vmatprep.subr.mxu0 0.0
        %904 = vmatpush1.msra.mxu0 %v400
        %905 = vmatprep.subr.mxu0 0.0
        %906 = vmatpush1.msra.mxu0 %v401
        %907 = vmatprep.subr.mxu0 0.0
        %908 = vmatpush1.msra.mxu0 %v402
        %909 = vmatprep.subr.mxu0 0.0
        %910 = vmatpush1.msra.mxu0 %v403
        %911 = vmatprep.subr.mxu0 0.0
        %912 = vmatpush1.msra.mxu0 %v404
        %913 = vmatprep.subr.mxu0 0.0
        %914 = vmatpush1.msra.mxu0 %v405
        %915 = vmatprep.subr.mxu0 0.0
        %916 = vmatpush1.msra.mxu0 %v406
        %917 = vmatprep.subr.mxu0 0.0
        %918 = vmatpush1.msra.mxu0 %v407
        %919 = vmatprep.subr.mxu0 0.0
        %920 = vmatpush1.msra.mxu0 %v408
        %921 = vmatprep.subr.mxu0 0.0
        %922 = vmatpush1.msra.mxu0 %v409
        %923 = vmatprep.subr.mxu0 0.0
        %924 = vmatpush1.msra.mxu0 %v410
        %925 = vmatprep.subr.mxu0 0.0
        %926 = vmatpush1.msra.mxu0 %v411
        %927 = vmatprep.subr.mxu0 0.0
        %928 = vmatpush1.msra.mxu0 %v412
        %929 = vmatprep.subr.mxu0 0.0
        %930 = vmatpush1.msra.mxu0 %v413
        %931 = vmatprep.subr.mxu0 0.0
        %932 = vmatpush1.msra.mxu0 %v414
        %933 = vmatprep.subr.mxu0 0.0
        %934 = vmatpush1.msra.mxu0 %v415
        %935 = vmatprep.subr.mxu0 0.0
        %936 = vmatpush1.msra.mxu0 %v416
        %937 = vmatprep.subr.mxu0 0.0
        %938 = vmatpush1.msra.mxu0 %v417
        %939 = vmatprep.subr.mxu0 0.0
        %940 = vmatpush1.msra.mxu0 %v418
        %941 = vmatprep.subr.mxu0 0.0
        %942 = vmatpush1.msra.mxu0 %v419
        %943 = vmatprep.subr.mxu0 0.0
        %944 = vmatpush1.msra.mxu0 %v420
        %945 = vmatprep.subr.mxu0 0.0
        %946 = vmatpush1.msra.mxu0 %v421
        %947 = vmatprep.subr.mxu0 0.0
        %948 = vmatpush1.msra.mxu0 %v422
        %949 = vmatprep.subr.mxu0 0.0
        %950 = vmatpush1.msra.mxu0 %v423
        %951 = vmatprep.subr.mxu0 0.0
        %952 = vmatpush1.msra.mxu0 %v424
        %953 = vmatprep.subr.mxu0 0.0
        %954 = vmatpush1.msra.mxu0 %v425
        %955 = vmatprep.subr.mxu0 0.0
        %956 = vmatpush1.msra.mxu0 %v426
        %957 = vmatprep.subr.mxu0 0.0
        %958 = vmatpush1.msra.mxu0 %v427
        %959 = vmatprep.subr.mxu0 0.0
        %960 = vmatpush1.msra.mxu0 %v428
        %961 = vmatprep.subr.mxu0 0.0
        %962 = vmatpush1.msra.mxu0 %v429
        %963 = vmatprep.subr.mxu0 0.0
        %964 = vmatpush1.msra.mxu0 %v430
        %965 = vmatprep.mubr.f32.mxu0 %v896
        %966 = vmatmul.mubr.f32.gmra.mrb[0].mxu0 %v894
        %v967 = vpop.f32.mrb[0].mxu0
        %v968 = vadd.f32 0.0, %v967
        %v969 = vpop.f32.mrb[0].mxu0
        %970 = vmatprep.mubr.f32.mxu0 %v900
        %971 = vmatmul.mubr.f32.gmra.mrb[0].mxu0 %v898
        %v972 = vpop.f32.mrb[0].mxu0
        %v973 = vadd.f32 0.0, %v972
        %v974 = vpop.f32.mrb[0].mxu0
        %975 = vdwg.mxu0
        %v976 = vsel %vm879, %v784, 0.0
        %v977 = vsel %vm880, %v786, 0.0
        %v978 = vsel %vm881, %v788, 0.0
        %v979 = vsel %vm882, %v790, 0.0
        %980 = vmatprep.subr.mxu0 0.0
        %981 = vmatpush1.msra.mxu0 %v399
        %982 = vmatprep.subr.mxu0 0.0
        %983 = vmatpush1.msra.mxu0 %v400
        %984 = vmatprep.subr.mxu0 0.0
        %985 = vmatpush1.msra.mxu0 %v401
        %986 = vmatprep.subr.mxu0 0.0
        %987 = vmatpush1.msra.mxu0 %v402
        %988 = vmatprep.subr.mxu0 0.0
        %989 = vmatpush1.msra.mxu0 %v403
        %990 = vmatprep.subr.mxu0 0.0
        %991 = vmatpush1.msra.mxu0 %v404
        %992 = vmatprep.subr.mxu0 0.0
        %993 = vmatpush1.msra.mxu0 %v405
        %994 = vmatprep.subr.mxu0 0.0
        %995 = vmatpush1.msra.mxu0 %v406
        %996 = vmatprep.subr.mxu0 0.0
        %997 = vmatpush1.msra.mxu0 %v407
        %998 = vmatprep.subr.mxu0 0.0
        %999 = vmatpush1.msra.mxu0 %v408
        %1000 = vmatprep.subr.mxu0 0.0
        %1001 = vmatpush1.msra.mxu0 %v409
        %1002 = vmatprep.subr.mxu0 0.0
        %1003 = vmatpush1.msra.mxu0 %v410
        %1004 = vmatprep.subr.mxu0 0.0
        %1005 = vmatpush1.msra.mxu0 %v411
        %1006 = vmatprep.subr.mxu0 0.0
        %1007 = vmatpush1.msra.mxu0 %v412
        %1008 = vmatprep.subr.mxu0 0.0
        %1009 = vmatpush1.msra.mxu0 %v413
        %1010 = vmatprep.subr.mxu0 0.0
        %1011 = vmatpush1.msra.mxu0 %v414
        %1012 = vmatprep.subr.mxu0 0.0
        %1013 = vmatpush1.msra.mxu0 %v415
        %1014 = vmatprep.subr.mxu0 0.0
        %1015 = vmatpush1.msra.mxu0 %v416
        %1016 = vmatprep.subr.mxu0 0.0
        %1017 = vmatpush1.msra.mxu0 %v417
        %1018 = vmatprep.subr.mxu0 0.0
        %1019 = vmatpush1.msra.mxu0 %v418
        %1020 = vmatprep.subr.mxu0 0.0
        %1021 = vmatpush1.msra.mxu0 %v419
        %1022 = vmatprep.subr.mxu0 0.0
        %1023 = vmatpush1.msra.mxu0 %v420
        %1024 = vmatprep.subr.mxu0 0.0
        %1025 = vmatpush1.msra.mxu0 %v421
        %1026 = vmatprep.subr.mxu0 0.0
        %1027 = vmatpush1.msra.mxu0 %v422
        %1028 = vmatprep.subr.mxu0 0.0
        %1029 = vmatpush1.msra.mxu0 %v423
        %1030 = vmatprep.subr.mxu0 0.0
        %1031 = vmatpush1.msra.mxu0 %v424
        %1032 = vmatprep.subr.mxu0 0.0
        %1033 = vmatpush1.msra.mxu0 %v425
        %1034 = vmatprep.subr.mxu0 0.0
        %1035 = vmatpush1.msra.mxu0 %v426
        %1036 = vmatprep.subr.mxu0 0.0
        %1037 = vmatpush1.msra.mxu0 %v427
        %1038 = vmatprep.subr.mxu0 0.0
        %1039 = vmatpush1.msra.mxu0 %v428
        %1040 = vmatprep.subr.mxu0 0.0
        %1041 = vmatpush1.msra.mxu0 %v429
        %1042 = vmatprep.subr.mxu0 0.0
        %1043 = vmatpush1.msra.mxu0 %v430
        %1044 = vmatprep.mubr.f32.mxu0 %v977
        %1045 = vmatmul.mubr.f32.gmra.mrb[0].mxu0 %v976
        %v1046 = vpop.f32.mrb[0].mxu0
        %v1047 = vadd.f32 0.0, %v1046
        %v1048 = vpop.f32.mrb[0].mxu0
        %1049 = vmatprep.mubr.f32.mxu0 %v979
        %1050 = vmatmul.mubr.f32.gmra.mrb[0].mxu0 %v978
        %v1051 = vpop.f32.mrb[0].mxu0
        %v1052 = vadd.f32 0.0, %v1051
        %v1053 = vpop.f32.mrb[0].mxu0
        %1054 = vdwg.mxu0
        %vm1055 = vcmp.ne.s32.totalorder %v792, 4294967196
        %vm1056 = vcmp.ne.s32.totalorder %v793, 4294967196
        %v1057 = vsel %vm1055, 1, 0
        %v1058 = vsel %vm1056, 1, 0
        %v1059 = vcvt.s32.f32 %v1057
        %v1060 = vcvt.s32.f32 %v1058
        %v1061 = vmax.f32 %v968, 1e-30
        %v1062 = vmax.f32 %v973, 1e-30
        %v1063 = vlog2.pop %v1061
        %v1064 = vmul.f32 %v1063, 0.6931472
        %v1065 = vlog2.pop %v1062
        %v1066 = vmul.f32 %v1065, 0.6931472
        %v1067 = vadd.f32 %v885, %v1064
        %v1068 = vadd.f32 %v888, %v1066
        %v1069 = vsub.f32 %v1067, %v1047
        %v1070 = vsub.f32 %v1068, %v1052
        %v1071 = vmul.f32 %v1059, %v1069
        %v1072 = vmul.f32 %v1060, %v1070
        %v1073 = vsel %vm435, %v1071, 0.0
        %v1074 = vsel %vm435, %v1072, 0.0
        %v1075 = vadd.f32 %v1073, %v1074
        %v1076 = vrot.slane %v1075, 4
        %v1077 = vadd.f32 %v1075, %v1076
        %v1078 = vrot.slane %v1077, 2
        %v1079 = vadd.f32 %v1077, %v1078
        %v1080 = vrot.slane %v1079, 1
        %v1081 = vadd.f32 %v1079, %v1080
        %v1082 = vsel %vm435, %v1059, 0.0
        %v1083 = vsel %vm435, %v1060, 0.0
        %v1084 = vadd.f32 %v1082, %v1083
        %v1085 = vrot.slane %v1084, 4
        %v1086 = vadd.f32 %v1084, %v1085
        %v1087 = vrot.slane %v1086, 2
        %v1088 = vadd.f32 %v1086, %v1087
        %v1089 = vrot.slane %v1088, 1
        %v1090 = vadd.f32 %v1088, %v1089
        %vm1091 = vcmask 1040384
        %v1092 = vsel %vm1091, %v1081, %v1090
        %v1093 = vld [vmem:[%s364] sm:$0x3]
        %v1094 = vadd.f32 %v1093, %v1092
        %vm1095 = vcmask 123904
        %1096 = vst.msk [vmem:[%s364] sm:$0x3] %vm1095, %v1094
        %s1097 = sand.u32 %s246, 1
        %s1098 = scalar_lea.sflag [#allocation3], %s1097
        %s1099 = sand.u32 %s246, 1
        %s1100 = smul.addr %s1099, 2
        %s1101 = scalar_lea.vmem [#allocation2], %s1100
        // Predicated region
        $region61: #{tpu_custom_call.1} parent=55 // pred_check
          %p1102 = pneg %p256
        $region62: #{tpu_custom_call.1} parent=55 // pred_check_branch
          %1104 = sbr.rel (%p1102) target = $region64
        $region63: #{tpu_custom_call.1} parent=55 // pred_region
          %s1106 = ssub.s32 32, 32
          %1107 = vsyncadd %s1098, %s1106
          %s1108 = smul.addr %s27, 32
          %s1109 = scalar_lea.hbm %s9, %s1108
          %s1111 = sshll.u32 %s1101, 4
          %s1112 = int_to_ptr.vmem [resolvable:$true] %s1111
          %1114 = dma.vmem_to_hbm [thread:$0]  %s1112, 32, %s1109, %s1098
        $region64: #{tpu_custom_call.1} parent=55 // pred_fallthru
          _
      $region56: #{tpu_custom_call.1} parent=5 // pred_fallthru
        _
      %p1115 = scmp.le.s32.totalorder 2, %s18
      // Predicated region
      $region65: #{tpu_custom_call.1} parent=5 // pred_check
        %p1116 = pneg %p1115
      $region66: #{tpu_custom_call.1} parent=5 // pred_check_branch
        %1118 = sbr.rel (%p1116) target = $region68
      $region67: #{tpu_custom_call.1} parent=5 // pred_region
        %s1119 = ssub.s32 %s18, 2
        // Predicated region
        $region69: #{tpu_custom_call.1} parent=67 // pred_check
          %p1120 = pneg %p262
        $region70: #{tpu_custom_call.1} parent=67 // pred_check_branch
          %1122 = sbr.rel (%p1120) target = $region72
        $region71: #{tpu_custom_call.1} parent=67 // pred_region
          %s1123 = sand.u32 %s247, 1
          %s1124 = scalar_lea.sflag [#allocation3], %s1123
          %s1125 = sand.u32 %s247, 1
          %s1126 = smul.addr %s1125, 2
          %s1127 = scalar_lea.vmem [#allocation2], %s1126
          %1128 = dma.done %s1124, 32
        $region72: #{tpu_custom_call.1} parent=67 // pred_fallthru
          _
      $region68: #{tpu_custom_call.1} parent=5 // pred_fallthru
        _
    $region6: #{tpu_custom_call.1} parent=1 // loop_footer
      %s22 = sadd.s32 1, %s18
    $region7: #{tpu_custom_call.1} parent=1 // loop_footer_branch
      %17 = sbr.rel target = $region3
    $region8: #{tpu_custom_call.1} parent=1 // loop_exit
      _
    %1129 = vsyncpa [#allocation3], 1
    %s1130 = scalar_lea.sflag [#allocation3], 1
    %1131 = vsyncpa %s1130, 1

</llo_original>
